<compile_context>
chip_gen: v7x
topology: tpu7x:2x2x1
jax: 0.10.0
libtpu: 0.0.40
codegen_flags: <defaults>
</compile_context>

<pallas_src>
import jax
import jax.numpy as jnp
from jax.experimental import pallas as pl
from jax.experimental.pallas import tpu as pltpu

LANE = 128


def _round_up(x, m):
    return ((x + m - 1) // m) * m


def _pad2d(x, rows, cols):
    out = jnp.zeros((rows, cols), x.dtype)
    return out.at[: x.shape[0], : x.shape[1]].set(x)


# ----------------------------------------------------------------------------
# Pallas kernel: one NGCF propagation layer.
# Grid = (row tiles, K tiles).  K is a reduction axis ("arbitrary"); the
# (tm, Din) f32 accumulator holds L[row_tile] @ ego.
# ----------------------------------------------------------------------------
def ngcf_layer_kernel(adj_ref, ego_full_ref, ego_tile_ref, w_ref, b_ref,
                      ego_out_ref, norm_out_ref, acc_ref):
    k = pl.program_id(1)

    @pl.when(k == 0)
    def _():
        acc_ref[...] = jnp.zeros_like(acc_ref)

    # L[row_tile, k_tile] @ ego[k_tile]  (bf16 inputs, f32 accumulate on MXU)
    acc_ref[...] += jnp.dot(adj_ref[...], ego_full_ref[...],
                            preferred_element_type=jnp.float32)

    @pl.when(k == pl.num_programs(1) - 1)
    def _():
        l_side = acc_ref[...]                       # L @ ego          (tm, Din)
        ego_t = ego_tile_ref[...]                   # ego[row_tile]    (tm, Din)
        l_i_side = l_side + ego_t                   # (L+I)@ego == L@ego + ego
        bi = l_side * ego_t                         # bi-interaction term

        # Fused projection: [L_I_side | bi] @ [W_gc ; W_bi] + (b_gc + b_bi)
        x = jnp.concatenate([l_i_side, bi], axis=1)             # (tm, 2*Din)
        e = jnp.dot(x, w_ref[...],
                    preferred_element_type=jnp.float32) + b_ref[...]
        e = jnp.where(e >= 0.0, e, 0.2 * e)         # LeakyReLU(0.2)
        ego_out_ref[...] = e

        # F.normalize(p=2, dim=1): x / max(||x||_2, 1e-12)
        ss = jnp.sum(e * e, axis=1, keepdims=True)
        inv = jax.lax.rsqrt(jnp.maximum(ss, 1e-24))   # EUP rsqrt, VALU multiply
        norm_out_ref[...] = e * inv


def ngcf_layer(adj_bf16, ego_f32, w_cat, b_cat, *, tm=128, tk=128):
    n_pad = adj_bf16.shape[0]
    d_in = ego_f32.shape[1]            # padded input width  (multiple of 128)
    d_out = w_cat.shape[1]             # padded output width (multiple of 128)
    assert n_pad % tm == 0 and n_pad % tk == 0
    ego_bf16 = ego_f32.astype(jnp.bfloat16)

    out_shapes = (jax.ShapeDtypeStruct((n_pad, d_out), jnp.float32),
                  jax.ShapeDtypeStruct((n_pad, d_out), jnp.float32))

    return pl.pallas_call(
        ngcf_layer_kernel,
        out_shape=out_shapes,
        grid_spec=pltpu.PrefetchScalarGridSpec(
            num_scalar_prefetch=0,
            grid=(n_pad // tm, n_pad // tk),
            in_specs=[
                pl.BlockSpec((tm, tk), lambda i, k: (i, k)),        # L tile (bf16)
                pl.BlockSpec((tk, d_in), lambda i, k: (k, 0)),      # ego K-block (bf16)
                pl.BlockSpec((tm, d_in), lambda i, k: (i, 0)),      # ego row tile (f32)
                pl.BlockSpec((2 * d_in, d_out), lambda i, k: (0, 0)),  # [W_gc;W_bi]
                pl.BlockSpec((1, d_out), lambda i, k: (0, 0)),      # b_gc + b_bi
            ],
            out_specs=[
                pl.BlockSpec((tm, d_out), lambda i, k: (i, 0)),     # new ego
                pl.BlockSpec((tm, d_out), lambda i, k: (i, 0)),     # normalized
            ],
            scratch_shapes=[pltpu.VMEM((tm, d_in), jnp.float32)],   # L @ ego acc
        ),
        compiler_params=pltpu.CompilerParams(
            dimension_semantics=("parallel", "arbitrary")),
    )(adj_bf16, ego_bf16, ego_f32, w_cat, b_cat)


# ----------------------------------------------------------------------------
# Forward pass glue (padding, per-layer loop, concat, row gathers).
# ----------------------------------------------------------------------------
def ngcf_forward(norm_adj, user_emb, item_emb, layer_weights,
                 users, pos_items, neg_items, *, tm=128, tk=128):
    n_user = user_emb.shape[0]
    n = n_user + item_emb.shape[0]
    n_pad = _round_up(n, max(tm, tk))

    ego = jnp.concatenate([user_emb, item_emb], axis=0)           # (N, D)
    d_in = ego.shape[1]
    d_in_pad = _round_up(d_in, LANE)

    adj_bf16 = _pad2d(norm_adj, n_pad, n_pad).astype(jnp.bfloat16)
    ego_p = _pad2d(ego, n_pad, d_in_pad)

    all_embeddings = [ego]
    for (w_gc, b_gc, w_bi, b_bi) in layer_weights:
        d_out = w_gc.shape[1]
        d_out_pad = _round_up(d_out, LANE)
        w_cat = jnp.concatenate([_pad2d(w_gc, d_in_pad, d_out_pad),
                                 _pad2d(w_bi, d_in_pad, d_out_pad)], axis=0)
        b_cat = _pad2d(b_gc + b_bi, 1, d_out_pad)
        ego_p, norm_p = ngcf_layer(adj_bf16, ego_p, w_cat, b_cat, tm=tm, tk=tk)
        all_embeddings.append(norm_p[:n, :d_out])
        d_in_pad = d_out_pad

    all_emb = jnp.concatenate(all_embeddings, axis=1)
    u_g = all_emb[:n_user, :]
    i_g = all_emb[n_user:, :]
    return u_g[users, :], i_g[pos_items, :], i_g[neg_items, :]


# ----------------------------------------------------------------------------
# Pure-JAX reference (dense, f32) used only for a sanity check in __main__.
# ----------------------------------------------------------------------------
def ngcf_reference(norm_adj, user_emb, item_emb, layer_weights,
                   users, pos_items, neg_items):
    n_user = user_emb.shape[0]
    adj_i = norm_adj + jnp.eye(norm_adj.shape[0], dtype=jnp.float32)
    ego = jnp.concatenate([user_emb, item_emb], axis=0)
    all_embeddings = [ego]
    for (w_gc, b_gc, w_bi, b_bi) in layer_weights:
        l_side = norm_adj @ ego
        l_i_side = adj_i @ ego
        sum_e = l_i_side @ w_gc + b_gc
        bi_e = (l_side * ego) @ w_bi + b_bi
        ego = jax.nn.leaky_relu(sum_e + bi_e, negative_slope=0.2)
        denom = jnp.maximum(
            jnp.sqrt(jnp.sum(ego * ego, axis=1, keepdims=True)), 1e-12)
        all_embeddings.append(ego / denom)
    all_emb = jnp.concatenate(all_embeddings, axis=1)
    u_g = all_emb[:n_user, :]
    i_g = all_emb[n_user:, :]
    return u_g[users, :], i_g[pos_items, :], i_g[neg_items, :]


# ----------------------------------------------------------------------------
# Deterministic parameter / adjacency construction.
# ----------------------------------------------------------------------------
def xavier_uniform(key, shape):
    fan_in, fan_out = shape[0], shape[1]
    limit = jnp.sqrt(6.0 / (fan_in + fan_out))
    return jax.random.uniform(key, shape, jnp.float32, -limit, limit)


def build_norm_adj(key, n_user, n_item):
    # random bipartite interactions -> symmetric normalized Laplacian (dense)
    r = (jax.random.uniform(key, (n_user, n_item)) < 0.3).astype(jnp.float32)
    N = n_user + n_item
    adj = jnp.zeros((N, N), jnp.float32)
    adj = adj.at[:n_user, n_user:].set(r)
    adj = adj.at[n_user:, :n_user].set(r.T)
    deg = jnp.sum(adj, axis=1)
    d_inv_sqrt = jnp.where(deg > 0, 1.0 / jnp.sqrt(jnp.maximum(deg, 1e-12)), 0.0)
    norm_adj = d_inv_sqrt[:, None] * adj * d_inv_sqrt[None, :]
    return norm_adj


if __name__ == "__main__":
    n_user, n_item = 8, 8
    emb_dim = 32
    layer_sizes = [32, 32]          # two NGCF propagation layers
    N = n_user + n_item

    key = jax.random.PRNGKey(0)
    keys = jax.random.split(key, 4 + 4 * len(layer_sizes))

    user_emb = xavier_uniform(keys[0], (n_user, emb_dim))
    item_emb = xavier_uniform(keys[1], (n_item, emb_dim))
    norm_adj = build_norm_adj(keys[2], n_user, n_item)          # L (dense, toy)

    dims = [emb_dim] + layer_sizes
    layer_weights = []
    for k in range(len(layer_sizes)):
        kk = keys[4 + 4 * k: 4 + 4 * (k + 1)]
        w_gc = xavier_uniform(kk[0], (dims[k], dims[k + 1]))
        b_gc = xavier_uniform(kk[1], (1, dims[k + 1]))
        w_bi = xavier_uniform(kk[2], (dims[k], dims[k + 1]))
        b_bi = xavier_uniform(kk[3], (1, dims[k + 1]))
        layer_weights.append((w_gc, b_gc, w_bi, b_bi))

    users = jnp.array([0, 3, 5, 7], dtype=jnp.int32)
    pos_items = jnp.array([1, 2, 4, 6], dtype=jnp.int32)
    neg_items = jnp.array([7, 0, 3, 5], dtype=jnp.int32)

    u_g, pos_g, neg_g = ngcf_forward(norm_adj, user_emb, item_emb,
                                     layer_weights, users, pos_items, neg_items)
    jax.block_until_ready((u_g, pos_g, neg_g))

    out_dim = emb_dim + sum(layer_sizes)
    assert u_g.shape == (4, out_dim)
    assert pos_g.shape == (4, out_dim)
    assert neg_g.shape == (4, out_dim)

    # Sanity check against a dense f32 reference (loose tol: bf16 MXU inputs).
    u_r, p_r, n_r = ngcf_reference(norm_adj, user_emb, item_emb,
                                   layer_weights, users, pos_items, neg_items)
    assert float(jnp.max(jnp.abs(u_g - u_r))) < 3e-2
    assert float(jnp.max(jnp.abs(pos_g - p_r))) < 3e-2
    assert float(jnp.max(jnp.abs(neg_g - n_r))) < 3e-2

    print("KERNEL_OK")
</pallas_src>

<mosaic_0001>
module attributes {stable_mosaic.version = 11 : i64} {
  func.func @ngcf_layer_kernel(%arg0: i32, %arg1: i32, %arg2: memref<128x128xbf16, #tpu.memory_space<vmem>>, %arg3: memref<128x128xbf16, #tpu.memory_space<vmem>>, %arg4: memref<128x128xf32, #tpu.memory_space<vmem>>, %arg5: memref<256x128xf32, #tpu.memory_space<vmem>>, %arg6: memref<1x128xf32, #tpu.memory_space<vmem>>, %arg7: memref<128x128xf32, #tpu.memory_space<vmem>>, %arg8: memref<128x128xf32, #tpu.memory_space<vmem>>, %arg9: memref<128x128xf32, #tpu.memory_space<vmem>>) attributes {dimension_semantics = [#tpu.dimension_semantics<parallel>, #tpu.dimension_semantics<arbitrary>], iteration_bounds = array<i64: 1, 1>, scalar_prefetch = 0 : i64, scratch_operands = 1 : i64, tpu.core_type = #tpu.core_type<tc>, window_params = [{transform_indices = @transform_0, window_bounds = array<i64: 128, 128>}, {transform_indices = @transform_1, window_bounds = array<i64: 128, 128>}, {transform_indices = @transform_2, window_bounds = array<i64: 128, 128>}, {pipeline_mode = #tpu.pipeline_mode<synchronous>, transform_indices = @transform_3, window_bounds = array<i64: 256, 128>}, {pipeline_mode = #tpu.pipeline_mode<synchronous>, transform_indices = @transform_4, window_bounds = array<i64: 1, 128>}, {transform_indices = @transform_5, window_bounds = array<i64: 128, 128>}, {transform_indices = @transform_6, window_bounds = array<i64: 128, 128>}]} {
    %c0_i32 = arith.constant 0 : i32
    %0 = arith.cmpi eq, %arg1, %c0_i32 : i32
    %1 = arith.extui %0 : i1 to i32
    %c0_i32_0 = arith.constant 0 : i32
    %2 = arith.cmpi ne, %1, %c0_i32_0 : i32
    scf.if %2 {
      %cst_10 = arith.constant 0.000000e+00 : f32
      %12 = vector.broadcast %cst_10 : f32 to vector<128x128xf32>
      %c0_11 = arith.constant 0 : index
      %c0_12 = arith.constant 0 : index
      %13 = vector.load %arg9[%c0_11, %c0_12] : memref<128x128xf32, #tpu.memory_space<vmem>>, vector<128x128xf32>
      tpu.vector_store %arg9[%c0_11, %c0_12], %12 {strides = array<i32>} : memref<128x128xf32, #tpu.memory_space<vmem>>, vector<128x128xf32>,
    } else {
    }
    %c0 = arith.constant 0 : index
    %c0_1 = arith.constant 0 : index
    %3 = vector.load %arg9[%c0, %c0_1] : memref<128x128xf32, #tpu.memory_space<vmem>>, vector<128x128xf32>
    %c0_2 = arith.constant 0 : index
    %c0_3 = arith.constant 0 : index
    %4 = vector.load %arg2[%c0_2, %c0_3] : memref<128x128xbf16, #tpu.memory_space<vmem>>, vector<128x128xbf16>
    %c0_4 = arith.constant 0 : index
    %c0_5 = arith.constant 0 : index
    %5 = vector.load %arg3[%c0_4, %c0_5] : memref<128x128xbf16, #tpu.memory_space<vmem>>, vector<128x128xbf16>
    %cst = arith.constant dense<0.000000e+00> : vector<128x128xf32>
    %6 = tpu.matmul %4, %5, %cst {dimension_numbers = #tpu.dot_dimension_numbers<[1], [0], [0], [1], [0, 0, 1, 1], [], []>} : vector<128x128xbf16>, vector<128x128xbf16>, vector<128x128xf32> -> vector<128x128xf32>
    %7 = arith.addf %3, %6 : vector<128x128xf32>
    %c0_6 = arith.constant 0 : index
    %c0_7 = arith.constant 0 : index
    %8 = vector.load %arg9[%c0_6, %c0_7] : memref<128x128xf32, #tpu.memory_space<vmem>>, vector<128x128xf32>
    tpu.vector_store %arg9[%c0_6, %c0_7], %7 {strides = array<i32>} : memref<128x128xf32, #tpu.memory_space<vmem>>, vector<128x128xf32>,
    %c0_i32_8 = arith.constant 0 : i32
    %9 = arith.cmpi eq, %arg1, %c0_i32_8 : i32
    %10 = arith.extui %9 : i1 to i32
    %c0_i32_9 = arith.constant 0 : i32
    %11 = arith.cmpi ne, %10, %c0_i32_9 : i32
    scf.if %11 {
      %c0_10 = arith.constant 0 : index
      %c0_11 = arith.constant 0 : index
      %12 = vector.load %arg9[%c0_10, %c0_11] : memref<128x128xf32, #tpu.memory_space<vmem>>, vector<128x128xf32>
      %c0_12 = arith.constant 0 : index
      %c0_13 = arith.constant 0 : index
      %13 = vector.load %arg4[%c0_12, %c0_13] : memref<128x128xf32, #tpu.memory_space<vmem>>, vector<128x128xf32>
      %14 = arith.addf %12, %13 : vector<128x128xf32>
      %15 = arith.mulf %12, %13 : vector<128x128xf32>
      %16 = tpu.concatenate %14, %15 in 1 : vector<128x128xf32>, vector<128x128xf32> -> vector<128x256xf32>
      %c0_14 = arith.constant 0 : index
      %c0_15 = arith.constant 0 : index
      %17 = vector.load %arg5[%c0_14, %c0_15] : memref<256x128xf32, #tpu.memory_space<vmem>>, vector<256x128xf32>
      %cst_16 = arith.constant dense<0.000000e+00> : vector<128x128xf32>
      %18 = tpu.matmul %16, %17, %cst_16 {dimension_numbers = #tpu.dot_dimension_numbers<[1], [0], [0], [1], [0, 0, 1, 1], [], []>} : vector<128x256xf32>, vector<256x128xf32>, vector<128x128xf32> -> vector<128x128xf32>
      %c0_17 = arith.constant 0 : index
      %c0_18 = arith.constant 0 : index
      %19 = vector.load %arg6[%c0_17, %c0_18] : memref<1x128xf32, #tpu.memory_space<vmem>>, vector<1x128xf32>
      %20 = vector.broadcast %19 : vector<1x128xf32> to vector<128x128xf32>
      %21 = arith.addf %18, %20 : vector<128x128xf32>
      %cst_19 = arith.constant 0.000000e+00 : f32
      %22 = vector.broadcast %cst_19 : f32 to vector<128x128xf32>
      %23 = arith.cmpf oge, %21, %22 : vector<128x128xf32>
      %cst_20 = arith.constant 2.000000e-01 : f32
      %24 = vector.broadcast %cst_20 : f32 to vector<128x128xf32>
      %25 = arith.mulf %24, %21 : vector<128x128xf32>
      %26 = arith.select %23, %21, %25 : vector<128x128xi1>, vector<128x128xf32>
      %c0_21 = arith.constant 0 : index
      %c0_22 = arith.constant 0 : index
      %27 = vector.load %arg7[%c0_21, %c0_22] : memref<128x128xf32, #tpu.memory_space<vmem>>, vector<128x128xf32>
      tpu.vector_store %arg7[%c0_21, %c0_22], %26 {strides = array<i32>} : memref<128x128xf32, #tpu.memory_space<vmem>>, vector<128x128xf32>,
      %28 = arith.mulf %26, %26 : vector<128x128xf32>
      %cst_23 = arith.constant dense<0.000000e+00> : vector<128xf32>
      %29 = vector.multi_reduction <add>, %28, %cst_23 [1] : vector<128x128xf32> to vector<128xf32>
      %30 = vector.shape_cast %29 : vector<128xf32> to vector<128x1xf32>
      %cst_24 = arith.constant 1.000000e-24 : f32
      %31 = vector.broadcast %cst_24 : f32 to vector<128x1xf32>
      %32 = arith.maximumf %30, %31 : vector<128x1xf32>
      %33 = math.rsqrt %32 : vector<128x1xf32>
      %34 = vector.broadcast %33 : vector<128x1xf32> to vector<128x128xf32>
      %35 = arith.mulf %26, %34 : vector<128x128xf32>
      %c0_25 = arith.constant 0 : index
      %c0_26 = arith.constant 0 : index
      %36 = vector.load %arg8[%c0_25, %c0_26] : memref<128x128xf32, #tpu.memory_space<vmem>>, vector<128x128xf32>
      tpu.vector_store %arg8[%c0_25, %c0_26], %35 {strides = array<i32>} : memref<128x128xf32, #tpu.memory_space<vmem>>, vector<128x128xf32>,
    } else {
    }
    return
  }
  func.func @transform_0(%arg0: i32, %arg1: i32) -> (i32, i32) {
    %c0_i32 = arith.constant 0 : i32
    return %arg0, %arg1 : i32, i32
  }
  func.func @transform_1(%arg0: i32, %arg1: i32) -> (i32, i32) {
    %c0_i32 = arith.constant 0 : i32
    %c0_i32_0 = arith.constant 0 : i32
    return %arg1, %c0_i32 : i32, i32
  }
  func.func @transform_2(%arg0: i32, %arg1: i32) -> (i32, i32) {
    %c0_i32 = arith.constant 0 : i32
    %c0_i32_0 = arith.constant 0 : i32
    return %arg0, %c0_i32 : i32, i32
  }
  func.func @transform_3(%arg0: i32, %arg1: i32) -> (i32, i32) {
    %c0_i32 = arith.constant 0 : i32
    %c0_i32_0 = arith.constant 0 : i32
    %c0_i32_1 = arith.constant 0 : i32
    return %c0_i32, %c0_i32_0 : i32, i32
  }
  func.func @transform_4(%arg0: i32, %arg1: i32) -> (i32, i32) {
    %c0_i32 = arith.constant 0 : i32
    %c0_i32_0 = arith.constant 0 : i32
    %c0_i32_1 = arith.constant 0 : i32
    return %c0_i32, %c0_i32_0 : i32, i32
  }
  func.func @transform_5(%arg0: i32, %arg1: i32) -> (i32, i32) {
    %c0_i32 = arith.constant 0 : i32
    %c0_i32_0 = arith.constant 0 : i32
    return %arg0, %c0_i32 : i32, i32
  }
  func.func @transform_6(%arg0: i32, %arg1: i32) -> (i32, i32) {
    %c0_i32 = arith.constant 0 : i32
    %c0_i32_0 = arith.constant 0 : i32
    return %arg0, %c0_i32 : i32, i32
  }
}

</mosaic_0001>

<llo_original>
// kernel: tpu_custom_call.1
$region0: #{tpu_custom_call.1}
  #allocation0 [shape = 'u32[]', space=smem, size = 0x4, offset = 0x4, fixed_abs, tag = 'smem constant byte address 0x4 - core index']
  #allocation1 [shape = 'u32[144,128]{1,0:T(1,128)}', space=vmem, size = 0x12000, scoped, tag = 'internal scratch']
  #allocation2 [shape = 'f32[128,128]{1,0:T(8,128)}', space=vmem, size = 0x10000, scoped, tag = 'scratch operand']
  %s0 = inlined_call_operand.hbm [shape: bf16[128,128], index: 0, kind: input, shape index: {}]
  %s1 = inlined_call_operand.hbm [shape: bf16[128,128], index: 1, kind: input, shape index: {}]
  %s2 = inlined_call_operand.hbm [shape: f32[128,128], index: 2, kind: input, shape index: {}]
  %s3 = inlined_call_operand.hbm [shape: f32[256,128], index: 3, kind: input, shape index: {}]
  %s4 = inlined_call_operand.vmem [shape: f32[1,128], index: 4, kind: input, shape index: {}]
  %s5 = inlined_call_operand.hbm [shape: f32[128,128], index: 5, kind: output, shape index: {0}]
  %s6 = inlined_call_operand.hbm [shape: f32[128,128], index: 6, kind: output, shape index: {1}]
  %7 = xla_tuple %s5, %s6
  %s8 = sld [smem:[#allocation0]]
  $region62: #{tpu_custom_call.1} parent=0
    _
  %s10 = ssub.s32 1, %s8
  %s11 = scalar_select 0, %s10, %s8
  $region1: #{tpu_custom_call.1} parent=0
    #allocation3 [shape = 'u8[32768]{0}', space=vmem, size = 0x8000, scoped, tag = 'input window, operand 0, single buffered']
    #allocation4 [shape = 's32[1]{0}', space=sflag, size = 0x4, scoped, tag = 'scoped memory for tpu_custom_call.1']
    #allocation5 [shape = 's32[1]{0}', space=sflag, size = 0x4, scoped, tag = 'scoped memory for tpu_custom_call.1']
    #allocation6 [shape = 'u8[32768]{0}', space=vmem, size = 0x8000, scoped, tag = 'input window, operand 1, single buffered']
    #allocation7 [shape = 's32[1]{0}', space=sflag, size = 0x4, scoped, tag = 'scoped memory for tpu_custom_call.1']
    #allocation8 [shape = 'u8[65536]{0}', space=vmem, size = 0x10000, scoped, tag = 'input window, operand 2, single buffered']
    #allocation9 [shape = 'u8[131072]{0}', space=vmem, size = 0x20000, scoped, tag = 'input window, operand 3, single buffered']
    #allocation10 [shape = 's32[1]{0}', space=sflag, size = 0x4, scoped, tag = 'scoped memory for tpu_custom_call.1']
    #allocation11 [shape = 'u8[65536]{0}', space=vmem, size = 0x10000, scoped, tag = 'output window, operand 0, single buffered']
    #allocation12 [shape = 'u8[65536]{0}', space=vmem, size = 0x10000, scoped, tag = 'output window, operand 1, single buffered']
    #allocation13 [shape = 's32[1]{0}', space=sflag, size = 0x4, scoped, tag = 'scoped memory for tpu_custom_call.1']
    %12 = vsyncpa [#allocation4], 0
    %13 = vsyncpa [#allocation7], 0
    %14 = vsyncpa [#allocation10], 0
    %15 = vsyncpa [#allocation5], 0
    %16 = vsyncpa [#allocation13], 0
    // Predicated region
    $region2: #{tpu_custom_call.1} parent=1 // pred_check
      _
    $region3: #{tpu_custom_call.1} parent=1 // pred_check_branch
      %18 = sbr.rel (0) target = $region5
    $region4: #{tpu_custom_call.1} parent=1 // pred_region
      %s20 = ssub.s32 1024, 1024
      %21 = vsyncadd [#allocation4], %s20
      %s22 = sshll.u32 [#allocation3], 4
      %s23 = int_to_ptr.vmem [resolvable:$true] %s22
      %28 = dma.hbm_to_vmem [thread:$0]  %s0, 1024, %s23, [#allocation4], 64, 64, 4
    $region5: #{tpu_custom_call.1} parent=1 // pred_fallthru
      _
    // Predicated region
    $region6: #{tpu_custom_call.1} parent=1 // pred_check
      _
    $region7: #{tpu_custom_call.1} parent=1 // pred_check_branch
      %30 = sbr.rel (0) target = $region9
    $region8: #{tpu_custom_call.1} parent=1 // pred_region
      %s32 = ssub.s32 1024, 1024
      %33 = vsyncadd [#allocation7], %s32
      %s34 = sshll.u32 [#allocation6], 4
      %s35 = int_to_ptr.vmem [resolvable:$true] %s34
      %40 = dma.hbm_to_vmem [thread:$0]  %s1, 1024, %s35, [#allocation7], 64, 64, 4
    $region9: #{tpu_custom_call.1} parent=1 // pred_fallthru
      _
    // Predicated region
    $region10: #{tpu_custom_call.1} parent=1 // pred_check
      _
    $region11: #{tpu_custom_call.1} parent=1 // pred_check_branch
      %42 = sbr.rel (0) target = $region13
    $region12: #{tpu_custom_call.1} parent=1 // pred_region
      %s44 = ssub.s32 2048, 2048
      %45 = vsyncadd [#allocation7], %s44
      %s46 = sshll.u32 [#allocation8], 4
      %s47 = int_to_ptr.vmem [resolvable:$true] %s46
      %52 = dma.hbm_to_vmem [thread:$0]  %s2, 2048, %s47, [#allocation7], 128, 128, 8
    $region13: #{tpu_custom_call.1} parent=1 // pred_fallthru
      _
    // Predicated region
    $region14: #{tpu_custom_call.1} parent=1 // pred_check
      _
    $region15: #{tpu_custom_call.1} parent=1 // pred_check_branch
      %54 = sbr.rel (0) target = $region17
    $region16: #{tpu_custom_call.1} parent=1 // pred_region
      %s56 = ssub.s32 4096, 4096
      %57 = vsyncadd [#allocation10], %s56
      %s58 = sshll.u32 [#allocation9], 4
      %s59 = int_to_ptr.vmem [resolvable:$true] %s58
      %64 = dma.hbm_to_vmem [thread:$0]  %s3, 4096, %s59, [#allocation10], 128, 128, 8
    $region17: #{tpu_custom_call.1} parent=1 // pred_fallthru
      _
    // Predicated region
    $region18: #{tpu_custom_call.1} parent=1 // pred_check
      _
    $region19: #{tpu_custom_call.1} parent=1 // pred_check_branch
      %66 = sbr.rel (0) target = $region21
    $region20: #{tpu_custom_call.1} parent=1 // pred_region
      _
    $region21: #{tpu_custom_call.1} parent=1 // pred_fallthru
      _
    // Predicated region
    $region22: #{tpu_custom_call.1} parent=1 // pred_check
      _
    $region23: #{tpu_custom_call.1} parent=1 // pred_check_branch
      %68 = sbr.rel (0) target = $region25
    $region24: #{tpu_custom_call.1} parent=1 // pred_region
      %69 = dma.done [#allocation4], 1024
    $region25: #{tpu_custom_call.1} parent=1 // pred_fallthru
      _
    // Predicated region
    $region26: #{tpu_custom_call.1} parent=1 // pred_check
      _
    $region27: #{tpu_custom_call.1} parent=1 // pred_check_branch
      %71 = sbr.rel (0) target = $region29
    $region28: #{tpu_custom_call.1} parent=1 // pred_region
      %72 = dma.done [#allocation7], 1024
    $region29: #{tpu_custom_call.1} parent=1 // pred_fallthru
      _
    // Predicated region
    $region30: #{tpu_custom_call.1} parent=1 // pred_check
      _
    $region31: #{tpu_custom_call.1} parent=1 // pred_check_branch
      %74 = sbr.rel (0) target = $region33
    $region32: #{tpu_custom_call.1} parent=1 // pred_region
      %75 = dma.done [#allocation7], 2048
    $region33: #{tpu_custom_call.1} parent=1 // pred_fallthru
      _
    // Predicated region
    $region34: #{tpu_custom_call.1} parent=1 // pred_check
      _
    $region35: #{tpu_custom_call.1} parent=1 // pred_check_branch
      %77 = sbr.rel (0) target = $region37
    $region36: #{tpu_custom_call.1} parent=1 // pred_region
      %78 = dma.done [#allocation10], 4096
    $region37: #{tpu_custom_call.1} parent=1 // pred_fallthru
      _
    %p80 = scmp.eq.s32.totalorder 0, 0
    // Predicated region
    $region38: #{tpu_custom_call.1} parent=1 // pred_check
      %p81 = pneg %p80
    $region39: #{tpu_custom_call.1} parent=1 // pred_check_branch
      %83 = sbr.rel (%p81) target = $region41
    $region40: #{tpu_custom_call.1} parent=1 // pred_region
      %84 = vst [vmem:[#allocation2] sm:$0xff] 0.0
      %85 = vst [vmem:[#allocation2 + $0x8] sm:$0xff] 0.0
      %86 = vst [vmem:[#allocation2 + $0x10] sm:$0xff] 0.0
      %87 = vst [vmem:[#allocation2 + $0x18] sm:$0xff] 0.0
      %88 = vst [vmem:[#allocation2 + $0x20] sm:$0xff] 0.0
      %89 = vst [vmem:[#allocation2 + $0x28] sm:$0xff] 0.0
      %90 = vst [vmem:[#allocation2 + $0x30] sm:$0xff] 0.0
      %91 = vst [vmem:[#allocation2 + $0x38] sm:$0xff] 0.0
      %92 = vst [vmem:[#allocation2 + $0x40] sm:$0xff] 0.0
      %93 = vst [vmem:[#allocation2 + $0x48] sm:$0xff] 0.0
      %94 = vst [vmem:[#allocation2 + $0x50] sm:$0xff] 0.0
      %95 = vst [vmem:[#allocation2 + $0x58] sm:$0xff] 0.0
      %96 = vst [vmem:[#allocation2 + $0x60] sm:$0xff] 0.0
      %97 = vst [vmem:[#allocation2 + $0x68] sm:$0xff] 0.0
      %98 = vst [vmem:[#allocation2 + $0x70] sm:$0xff] 0.0
      %99 = vst [vmem:[#allocation2 + $0x78] sm:$0xff] 0.0
    $region41: #{tpu_custom_call.1} parent=1 // pred_fallthru
      _
    %v100 = vld [vmem:[#allocation2] sm:$0xff]
    %v101 = vld [vmem:[#allocation2 + $0x8] sm:$0xff]
    %v102 = vld [vmem:[#allocation2 + $0x10] sm:$0xff]
    %v103 = vld [vmem:[#allocation2 + $0x18] sm:$0xff]
    %v104 = vld [vmem:[#allocation2 + $0x20] sm:$0xff]
    %v105 = vld [vmem:[#allocation2 + $0x28] sm:$0xff]
    %v106 = vld [vmem:[#allocation2 + $0x30] sm:$0xff]
    %v107 = vld [vmem:[#allocation2 + $0x38] sm:$0xff]
    %v108 = vld [vmem:[#allocation2 + $0x40] sm:$0xff]
    %v109 = vld [vmem:[#allocation2 + $0x48] sm:$0xff]
    %v110 = vld [vmem:[#allocation2 + $0x50] sm:$0xff]
    %v111 = vld [vmem:[#allocation2 + $0x58] sm:$0xff]
    %v112 = vld [vmem:[#allocation2 + $0x60] sm:$0xff]
    %v113 = vld [vmem:[#allocation2 + $0x68] sm:$0xff]
    %v114 = vld [vmem:[#allocation2 + $0x70] sm:$0xff]
    %v115 = vld [vmem:[#allocation2 + $0x78] sm:$0xff]
    %v116 = vld [vmem:[#allocation3] sm:$0xf]
    %v117 = vld [vmem:[#allocation3 + $0x4] sm:$0xf]
    %v118 = vld [vmem:[#allocation3 + $0x8] sm:$0xf]
    %v119 = vld [vmem:[#allocation3 + $0xc] sm:$0xf]
    %v120 = vld [vmem:[#allocation3 + $0x10] sm:$0xf]
    %v121 = vld [vmem:[#allocation3 + $0x14] sm:$0xf]
    %v122 = vld [vmem:[#allocation3 + $0x18] sm:$0xf]
    %v123 = vld [vmem:[#allocation3 + $0x1c] sm:$0xf]
    %v124 = vld [vmem:[#allocation3 + $0x20] sm:$0xf]
    %v125 = vld [vmem:[#allocation3 + $0x24] sm:$0xf]
    %v126 = vld [vmem:[#allocation3 + $0x28] sm:$0xf]
    %v127 = vld [vmem:[#allocation3 + $0x2c] sm:$0xf]
    %v128 = vld [vmem:[#allocation3 + $0x30] sm:$0xf]
    %v129 = vld [vmem:[#allocation3 + $0x34] sm:$0xf]
    %v130 = vld [vmem:[#allocation3 + $0x38] sm:$0xf]
    %v131 = vld [vmem:[#allocation3 + $0x3c] sm:$0xf]
    %v132 = vld [vmem:[#allocation6] sm:$0xf]
    %v133 = vld [vmem:[#allocation6 + $0x4] sm:$0xf]
    %v134 = vld [vmem:[#allocation6 + $0x8] sm:$0xf]
    %v135 = vld [vmem:[#allocation6 + $0xc] sm:$0xf]
    %v136 = vld [vmem:[#allocation6 + $0x10] sm:$0xf]
    %v137 = vld [vmem:[#allocation6 + $0x14] sm:$0xf]
    %v138 = vld [vmem:[#allocation6 + $0x18] sm:$0xf]
    %v139 = vld [vmem:[#allocation6 + $0x1c] sm:$0xf]
    %v140 = vld [vmem:[#allocation6 + $0x20] sm:$0xf]
    %v141 = vld [vmem:[#allocation6 + $0x24] sm:$0xf]
    %v142 = vld [vmem:[#allocation6 + $0x28] sm:$0xf]
    %v143 = vld [vmem:[#allocation6 + $0x2c] sm:$0xf]
    %v144 = vld [vmem:[#allocation6 + $0x30] sm:$0xf]
    %v145 = vld [vmem:[#allocation6 + $0x34] sm:$0xf]
    %v146 = vld [vmem:[#allocation6 + $0x38] sm:$0xf]
    %v147 = vld [vmem:[#allocation6 + $0x3c] sm:$0xf]
    %v164 = vunpack.c.l.b16 %v116
    %v165 = vunpack.c.l.b16 %v117
    %v166 = vunpack.c.l.b16 %v118
    %v167 = vunpack.c.l.b16 %v119
    %v168 = vunpack.c.l.b16 %v120
    %v169 = vunpack.c.l.b16 %v121
    %v170 = vunpack.c.l.b16 %v122
    %v171 = vunpack.c.l.b16 %v123
    %v172 = vunpack.c.l.b16 %v124
    %v173 = vunpack.c.l.b16 %v125
    %v174 = vunpack.c.l.b16 %v126
    %v175 = vunpack.c.l.b16 %v127
    %v176 = vunpack.c.l.b16 %v128
    %v177 = vunpack.c.l.b16 %v129
    %v178 = vunpack.c.l.b16 %v130
    %v179 = vunpack.c.l.b16 %v131
    %v180 = vpack.c.b16 %v165, %v164
    %v181 = vpack.c.b16 %v167, %v166
    %v182 = vpack.c.b16 %v169, %v168
    %v183 = vpack.c.b16 %v171, %v170
    %v184 = vpack.c.b16 %v173, %v172
    %v185 = vpack.c.b16 %v175, %v174
    %v186 = vpack.c.b16 %v177, %v176
    %v187 = vpack.c.b16 %v179, %v178
    %v212 = vunpack.c.l.b16 %v132
    %v213 = vunpack.c.l.b16 %v133
    %v214 = vunpack.c.l.b16 %v134
    %v215 = vunpack.c.l.b16 %v135
    %v216 = vunpack.c.l.b16 %v136
    %v217 = vunpack.c.l.b16 %v137
    %v218 = vunpack.c.l.b16 %v138
    %v219 = vunpack.c.l.b16 %v139
    %v220 = vunpack.c.l.b16 %v140
    %v221 = vunpack.c.l.b16 %v141
    %v222 = vunpack.c.l.b16 %v142
    %v223 = vunpack.c.l.b16 %v143
    %v224 = vunpack.c.l.b16 %v144
    %v225 = vunpack.c.l.b16 %v145
    %v226 = vunpack.c.l.b16 %v146
    %v227 = vunpack.c.l.b16 %v147
    %v228 = vpack.c.b16 %v213, %v212
    %v229 = vpack.c.b16 %v215, %v214
    %v230 = vpack.c.b16 %v217, %v216
    %v231 = vpack.c.b16 %v219, %v218
    %v232 = vpack.c.b16 %v221, %v220
    %v233 = vpack.c.b16 %v223, %v222
    %v234 = vpack.c.b16 %v225, %v224
    %v235 = vpack.c.b16 %v227, %v226
    %244 = vmatprep.subr.bf16.mxu0 0
    %245 = vmatpush1.bf16.msra.mxu0 %v228
    %246 = vmatprep.subr.bf16.mxu0 0
    %247 = vmatpush1.bf16.msra.mxu0 %v229
    %248 = vmatprep.subr.bf16.mxu0 0
    %249 = vmatpush1.bf16.msra.mxu0 %v230
    %250 = vmatprep.subr.bf16.mxu0 0
    %251 = vmatpush1.bf16.msra.mxu0 %v231
    %252 = vmatprep.subr.bf16.mxu0 0
    %253 = vmatpush1.bf16.msra.mxu0 %v232
    %254 = vmatprep.subr.bf16.mxu0 0
    %255 = vmatpush1.bf16.msra.mxu0 %v233
    %256 = vmatprep.subr.bf16.mxu0 0
    %257 = vmatpush1.bf16.msra.mxu0 %v234
    %258 = vmatprep.subr.bf16.mxu0 0
    %259 = vmatpush1.bf16.msra.mxu0 %v235
    %260 = vmatprep.subr.bf16.mxu0 0
    %261 = vmatpush1.bf16.msra.mxu0 0
    %262 = vmatprep.subr.bf16.mxu0 0
    %263 = vmatpush1.bf16.msra.mxu0 0
    %264 = vmatprep.subr.bf16.mxu0 0
    %265 = vmatpush1.bf16.msra.mxu0 0
    %266 = vmatprep.subr.bf16.mxu0 0
    %267 = vmatpush1.bf16.msra.mxu0 0
    %268 = vmatprep.subr.bf16.mxu0 0
    %269 = vmatpush1.bf16.msra.mxu0 0
    %270 = vmatprep.subr.bf16.mxu0 0
    %271 = vmatpush1.bf16.msra.mxu0 0
    %272 = vmatprep.subr.bf16.mxu0 0
    %273 = vmatpush1.bf16.msra.mxu0 0
    %274 = vmatprep.subr.bf16.mxu0 0
    %275 = vmatpush1.bf16.msra.mxu0 0
    %276 = vmatprep.mubr.bf16.mxu0 0
    %277 = vmatmul.mubr.bf16.gmra.mrb[0].mxu0 %v180
    %v278 = vpop.f32.mrb[0].mxu0
    %v279 = vadd.f32 0.0, %v278
    %v280 = vpop.f32.mrb[0].mxu0
    %v281 = vpop.f32.mrb[0].mxu0
    %v282 = vadd.f32 0.0, %v281
    %v283 = vpop.f32.mrb[0].mxu0
    %284 = vmatprep.mubr.bf16.mxu0 0
    %285 = vmatmul.mubr.bf16.gmra.mrb[0].mxu0 %v181
    %v286 = vpop.f32.mrb[0].mxu0
    %v287 = vadd.f32 0.0, %v286
    %v288 = vpop.f32.mrb[0].mxu0
    %v289 = vpop.f32.mrb[0].mxu0
    %v290 = vadd.f32 0.0, %v289
    %v291 = vpop.f32.mrb[0].mxu0
    %292 = vmatprep.mubr.bf16.mxu0 0
    %293 = vmatmul.mubr.bf16.gmra.mrb[0].mxu0 %v182
    %v294 = vpop.f32.mrb[0].mxu0
    %v295 = vadd.f32 0.0, %v294
    %v296 = vpop.f32.mrb[0].mxu0
    %v297 = vpop.f32.mrb[0].mxu0
    %v298 = vadd.f32 0.0, %v297
    %v299 = vpop.f32.mrb[0].mxu0
    %300 = vmatprep.mubr.bf16.mxu0 0
    %301 = vmatmul.mubr.bf16.gmra.mrb[0].mxu0 %v183
    %v302 = vpop.f32.mrb[0].mxu0
    %v303 = vadd.f32 0.0, %v302
    %v304 = vpop.f32.mrb[0].mxu0
    %v305 = vpop.f32.mrb[0].mxu0
    %v306 = vadd.f32 0.0, %v305
    %v307 = vpop.f32.mrb[0].mxu0
    %308 = vmatprep.mubr.bf16.mxu0 0
    %309 = vmatmul.mubr.bf16.gmra.mrb[0].mxu0 %v184
    %v310 = vpop.f32.mrb[0].mxu0
    %v311 = vadd.f32 0.0, %v310
    %v312 = vpop.f32.mrb[0].mxu0
    %v313 = vpop.f32.mrb[0].mxu0
    %v314 = vadd.f32 0.0, %v313
    %v315 = vpop.f32.mrb[0].mxu0
    %316 = vmatprep.mubr.bf16.mxu0 0
    %317 = vmatmul.mubr.bf16.gmra.mrb[0].mxu0 %v185
    %v318 = vpop.f32.mrb[0].mxu0
    %v319 = vadd.f32 0.0, %v318
    %v320 = vpop.f32.mrb[0].mxu0
    %v321 = vpop.f32.mrb[0].mxu0
    %v322 = vadd.f32 0.0, %v321
    %v323 = vpop.f32.mrb[0].mxu0
    %324 = vmatprep.mubr.bf16.mxu0 0
    %325 = vmatmul.mubr.bf16.gmra.mrb[0].mxu0 %v186
    %v326 = vpop.f32.mrb[0].mxu0
    %v327 = vadd.f32 0.0, %v326
    %v328 = vpop.f32.mrb[0].mxu0
    %v329 = vpop.f32.mrb[0].mxu0
    %v330 = vadd.f32 0.0, %v329
    %v331 = vpop.f32.mrb[0].mxu0
    %332 = vmatprep.mubr.bf16.mxu0 0
    %333 = vmatmul.mubr.bf16.gmra.mrb[0].mxu0 %v187
    %v334 = vpop.f32.mrb[0].mxu0
    %v335 = vadd.f32 0.0, %v334
    %v336 = vpop.f32.mrb[0].mxu0
    %v337 = vpop.f32.mrb[0].mxu0
    %v338 = vadd.f32 0.0, %v337
    %v339 = vpop.f32.mrb[0].mxu0
    %340 = vdwg.mxu0
    %v341 = vadd.f32 %v100, %v279
    %v342 = vadd.f32 %v101, %v282
    %v343 = vadd.f32 %v102, %v287
    %v344 = vadd.f32 %v103, %v290
    %v345 = vadd.f32 %v104, %v295
    %v346 = vadd.f32 %v105, %v298
    %v347 = vadd.f32 %v106, %v303
    %v348 = vadd.f32 %v107, %v306
    %v349 = vadd.f32 %v108, %v311
    %v350 = vadd.f32 %v109, %v314
    %v351 = vadd.f32 %v110, %v319
    %v352 = vadd.f32 %v111, %v322
    %v353 = vadd.f32 %v112, %v327
    %v354 = vadd.f32 %v113, %v330
    %v355 = vadd.f32 %v114, %v335
    %v356 = vadd.f32 %v115, %v338
    %357 = vst [vmem:[#allocation2] sm:$0xff] %v341
    %358 = vst [vmem:[#allocation2 + $0x8] sm:$0xff] %v342
    %359 = vst [vmem:[#allocation2 + $0x10] sm:$0xff] %v343
    %360 = vst [vmem:[#allocation2 + $0x18] sm:$0xff] %v344
    %361 = vst [vmem:[#allocation2 + $0x20] sm:$0xff] %v345
    %362 = vst [vmem:[#allocation2 + $0x28] sm:$0xff] %v346
    %363 = vst [vmem:[#allocation2 + $0x30] sm:$0xff] %v347
    %364 = vst [vmem:[#allocation2 + $0x38] sm:$0xff] %v348
    %365 = vst [vmem:[#allocation2 + $0x40] sm:$0xff] %v349
    %366 = vst [vmem:[#allocation2 + $0x48] sm:$0xff] %v350
    %367 = vst [vmem:[#allocation2 + $0x50] sm:$0xff] %v351
    %368 = vst [vmem:[#allocation2 + $0x58] sm:$0xff] %v352
    %369 = vst [vmem:[#allocation2 + $0x60] sm:$0xff] %v353
    %370 = vst [vmem:[#allocation2 + $0x68] sm:$0xff] %v354
    %371 = vst [vmem:[#allocation2 + $0x70] sm:$0xff] %v355
    %372 = vst [vmem:[#allocation2 + $0x78] sm:$0xff] %v356
    // Predicated region
    $region42: #{tpu_custom_call.1} parent=1 // pred_check
      %p373 = pneg %p80
    $region43: #{tpu_custom_call.1} parent=1 // pred_check_branch
      %375 = sbr.rel (%p373) target = $region45
    $region44: #{tpu_custom_call.1} parent=1 // pred_region
      %v376 = vld [vmem:[#allocation2] sm:$0xff]
      %v377 = vld [vmem:[#allocation2 + $0x8] sm:$0xff]
      %v378 = vld [vmem:[#allocation2 + $0x10] sm:$0xff]
      %v379 = vld [vmem:[#allocation2 + $0x18] sm:$0xff]
      %v380 = vld [vmem:[#allocation2 + $0x20] sm:$0xff]
      %v381 = vld [vmem:[#allocation2 + $0x28] sm:$0xff]
      %v382 = vld [vmem:[#allocation2 + $0x30] sm:$0xff]
      %v383 = vld [vmem:[#allocation2 + $0x38] sm:$0xff]
      %v384 = vld [vmem:[#allocation2 + $0x40] sm:$0xff]
      %v385 = vld [vmem:[#allocation2 + $0x48] sm:$0xff]
      %v386 = vld [vmem:[#allocation2 + $0x50] sm:$0xff]
      %v387 = vld [vmem:[#allocation2 + $0x58] sm:$0xff]
      %v388 = vld [vmem:[#allocation2 + $0x60] sm:$0xff]
      %v389 = vld [vmem:[#allocation2 + $0x68] sm:$0xff]
      %v390 = vld [vmem:[#allocation2 + $0x70] sm:$0xff]
      %v391 = vld [vmem:[#allocation2 + $0x78] sm:$0xff]
      %v392 = vld [vmem:[#allocation8] sm:$0xff]
      %v393 = vld [vmem:[#allocation8 + $0x8] sm:$0xff]
      %v394 = vld [vmem:[#allocation8 + $0x10] sm:$0xff]
      %v395 = vld [vmem:[#allocation8 + $0x18] sm:$0xff]
      %v396 = vld [vmem:[#allocation8 + $0x20] sm:$0xff]
      %v397 = vld [vmem:[#allocation8 + $0x28] sm:$0xff]
      %v398 = vld [vmem:[#allocation8 + $0x30] sm:$0xff]
      %v399 = vld [vmem:[#allocation8 + $0x38] sm:$0xff]
      %v400 = vld [vmem:[#allocation8 + $0x40] sm:$0xff]
      %v401 = vld [vmem:[#allocation8 + $0x48] sm:$0xff]
      %v402 = vld [vmem:[#allocation8 + $0x50] sm:$0xff]
      %v403 = vld [vmem:[#allocation8 + $0x58] sm:$0xff]
      %v404 = vld [vmem:[#allocation8 + $0x60] sm:$0xff]
      %v405 = vld [vmem:[#allocation8 + $0x68] sm:$0xff]
      %v406 = vld [vmem:[#allocation8 + $0x70] sm:$0xff]
      %v407 = vld [vmem:[#allocation8 + $0x78] sm:$0xff]
      %v408 = vadd.f32 %v376, %v392
      %v409 = vadd.f32 %v377, %v393
      %v410 = vadd.f32 %v378, %v394
      %v411 = vadd.f32 %v379, %v395
      %v412 = vadd.f32 %v380, %v396
      %v413 = vadd.f32 %v381, %v397
      %v414 = vadd.f32 %v382, %v398
      %v415 = vadd.f32 %v383, %v399
      %v416 = vadd.f32 %v384, %v400
      %v417 = vadd.f32 %v385, %v401
      %v418 = vadd.f32 %v386, %v402
      %v419 = vadd.f32 %v387, %v403
      %v420 = vadd.f32 %v388, %v404
      %v421 = vadd.f32 %v389, %v405
      %v422 = vadd.f32 %v390, %v406
      %v423 = vadd.f32 %v391, %v407
      %v424 = vmul.f32 %v376, %v392
      %v425 = vmul.f32 %v377, %v393
      %v426 = vmul.f32 %v378, %v394
      %v427 = vmul.f32 %v379, %v395
      %v428 = vmul.f32 %v380, %v396
      %v429 = vmul.f32 %v381, %v397
      %v430 = vmul.f32 %v382, %v398
      %v431 = vmul.f32 %v383, %v399
      %v432 = vmul.f32 %v384, %v400
      %v433 = vmul.f32 %v385, %v401
      %v434 = vmul.f32 %v386, %v402
      %v435 = vmul.f32 %v387, %v403
      %v436 = vmul.f32 %v388, %v404
      %v437 = vmul.f32 %v389, %v405
      %v438 = vmul.f32 %v390, %v406
      %v439 = vmul.f32 %v391, %v407
      %v440 = vld [vmem:[#allocation9] sm:$0xff]
      %v441 = vld [vmem:[#allocation9 + $0x8] sm:$0xff]
      %v442 = vld [vmem:[#allocation9 + $0x10] sm:$0xff]
      %v443 = vld [vmem:[#allocation9 + $0x18] sm:$0xff]
      %v444 = vld [vmem:[#allocation9 + $0x20] sm:$0xff]
      %v445 = vld [vmem:[#allocation9 + $0x28] sm:$0xff]
      %v446 = vld [vmem:[#allocation9 + $0x30] sm:$0xff]
      %v447 = vld [vmem:[#allocation9 + $0x38] sm:$0xff]
      %v448 = vld [vmem:[#allocation9 + $0x40] sm:$0xff]
      %v449 = vld [vmem:[#allocation9 + $0x48] sm:$0xff]
      %v450 = vld [vmem:[#allocation9 + $0x50] sm:$0xff]
      %v451 = vld [vmem:[#allocation9 + $0x58] sm:$0xff]
      %v452 = vld [vmem:[#allocation9 + $0x60] sm:$0xff]
      %v453 = vld [vmem:[#allocation9 + $0x68] sm:$0xff]
      %v454 = vld [vmem:[#allocation9 + $0x70] sm:$0xff]
      %v455 = vld [vmem:[#allocation9 + $0x78] sm:$0xff]
      %v456 = vld [vmem:[#allocation9 + $0x80] sm:$0xff]
      %v457 = vld [vmem:[#allocation9 + $0x88] sm:$0xff]
      %v458 = vld [vmem:[#allocation9 + $0x90] sm:$0xff]
      %v459 = vld [vmem:[#allocation9 + $0x98] sm:$0xff]
      %v460 = vld [vmem:[#allocation9 + $0xa0] sm:$0xff]
      %v461 = vld [vmem:[#allocation9 + $0xa8] sm:$0xff]
      %v462 = vld [vmem:[#allocation9 + $0xb0] sm:$0xff]
      %v463 = vld [vmem:[#allocation9 + $0xb8] sm:$0xff]
      %v464 = vld [vmem:[#allocation9 + $0xc0] sm:$0xff]
      %v465 = vld [vmem:[#allocation9 + $0xc8] sm:$0xff]
      %v466 = vld [vmem:[#allocation9 + $0xd0] sm:$0xff]
      %v467 = vld [vmem:[#allocation9 + $0xd8] sm:$0xff]
      %v468 = vld [vmem:[#allocation9 + $0xe0] sm:$0xff]
      %v469 = vld [vmem:[#allocation9 + $0xe8] sm:$0xff]
      %v470 = vld [vmem:[#allocation9 + $0xf0] sm:$0xff]
      %v471 = vld [vmem:[#allocation9 + $0xf8] sm:$0xff]
      %v472 = vld [vmem:[%s4] sm:$0x1]
      %v474 = vlaneseq
      %v475 = vshrl.u32 %v474, 7
      %v476 = vsub.s32 0, %v475
      %v477 = vrot.slane %v472, %v476
      %479 = vmatprep.subr.mxu0 0.0
      %480 = vmatpush1.msra.mxu0 %v440
      %481 = vmatprep.subr.mxu0 0.0
      %482 = vmatpush1.msra.mxu0 %v441
      %483 = vmatprep.subr.mxu0 0.0
      %484 = vmatpush1.msra.mxu0 %v442
      %485 = vmatprep.subr.mxu0 0.0
      %486 = vmatpush1.msra.mxu0 %v443
      %487 = vmatprep.subr.mxu0 0.0
      %488 = vmatpush1.msra.mxu0 %v444
      %489 = vmatprep.subr.mxu0 0.0
      %490 = vmatpush1.msra.mxu0 %v445
      %491 = vmatprep.subr.mxu0 0.0
      %492 = vmatpush1.msra.mxu0 %v446
      %493 = vmatprep.subr.mxu0 0.0
      %494 = vmatpush1.msra.mxu0 %v447
      %495 = vmatprep.subr.mxu0 0.0
      %496 = vmatpush1.msra.mxu0 %v448
      %497 = vmatprep.subr.mxu0 0.0
      %498 = vmatpush1.msra.mxu0 %v449
      %499 = vmatprep.subr.mxu0 0.0
      %500 = vmatpush1.msra.mxu0 %v450
      %501 = vmatprep.subr.mxu0 0.0
      %502 = vmatpush1.msra.mxu0 %v451
      %503 = vmatprep.subr.mxu0 0.0
      %504 = vmatpush1.msra.mxu0 %v452
      %505 = vmatprep.subr.mxu0 0.0
      %506 = vmatpush1.msra.mxu0 %v453
      %507 = vmatprep.subr.mxu0 0.0
      %508 = vmatpush1.msra.mxu0 %v454
      %509 = vmatprep.subr.mxu0 0.0
      %510 = vmatpush1.msra.mxu0 %v455
      %511 = vmatprep.subr.mxu0 0.0
      %512 = vmatpush1.msra.mxu0 %v456
      %513 = vmatprep.subr.mxu0 0.0
      %514 = vmatpush1.msra.mxu0 %v457
      %515 = vmatprep.subr.mxu0 0.0
      %516 = vmatpush1.msra.mxu0 %v458
      %517 = vmatprep.subr.mxu0 0.0
      %518 = vmatpush1.msra.mxu0 %v459
      %519 = vmatprep.subr.mxu0 0.0
      %520 = vmatpush1.msra.mxu0 %v460
      %521 = vmatprep.subr.mxu0 0.0
      %522 = vmatpush1.msra.mxu0 %v461
      %523 = vmatprep.subr.mxu0 0.0
      %524 = vmatpush1.msra.mxu0 %v462
      %525 = vmatprep.subr.mxu0 0.0
      %526 = vmatpush1.msra.mxu0 %v463
      %527 = vmatprep.subr.mxu0 0.0
      %528 = vmatpush1.msra.mxu0 %v464
      %529 = vmatprep.subr.mxu0 0.0
      %530 = vmatpush1.msra.mxu0 %v465
      %531 = vmatprep.subr.mxu0 0.0
      %532 = vmatpush1.msra.mxu0 %v466
      %533 = vmatprep.subr.mxu0 0.0
      %534 = vmatpush1.msra.mxu0 %v467
      %535 = vmatprep.subr.mxu0 0.0
      %536 = vmatpush1.msra.mxu0 %v468
      %537 = vmatprep.subr.mxu0 0.0
      %538 = vmatpush1.msra.mxu0 %v469
      %539 = vmatprep.subr.mxu0 0.0
      %540 = vmatpush1.msra.mxu0 %v470
      %541 = vmatprep.subr.mxu0 0.0
      %542 = vmatpush1.msra.mxu0 %v471
      %543 = vmatprep.mubr.f32.mxu0 %v424
      %544 = vmatmul.mubr.f32.gmra.mrb[0].mxu0 %v408
      %v545 = vpop.f32.mrb[0].mxu0
      %v546 = vadd.f32 %v477, %v545
      %v547 = vpop.f32.mrb[0].mxu0
      %548 = vmatprep.mubr.f32.mxu0 %v425
      %549 = vmatmul.mubr.f32.gmra.mrb[0].mxu0 %v409
      %v550 = vpop.f32.mrb[0].mxu0
      %v551 = vadd.f32 %v477, %v550
      %v552 = vpop.f32.mrb[0].mxu0
      %553 = vmatprep.mubr.f32.mxu0 %v426
      %554 = vmatmul.mubr.f32.gmra.mrb[0].mxu0 %v410
      %v555 = vpop.f32.mrb[0].mxu0
      %v556 = vadd.f32 %v477, %v555
      %v557 = vpop.f32.mrb[0].mxu0
      %558 = vmatprep.mubr.f32.mxu0 %v427
      %559 = vmatmul.mubr.f32.gmra.mrb[0].mxu0 %v411
      %v560 = vpop.f32.mrb[0].mxu0
      %v561 = vadd.f32 %v477, %v560
      %v562 = vpop.f32.mrb[0].mxu0
      %563 = vmatprep.mubr.f32.mxu0 %v428
      %564 = vmatmul.mubr.f32.gmra.mrb[0].mxu0 %v412
      %v565 = vpop.f32.mrb[0].mxu0
      %v566 = vadd.f32 %v477, %v565
      %v567 = vpop.f32.mrb[0].mxu0
      %568 = vmatprep.mubr.f32.mxu0 %v429
      %569 = vmatmul.mubr.f32.gmra.mrb[0].mxu0 %v413
      %v570 = vpop.f32.mrb[0].mxu0
      %v571 = vadd.f32 %v477, %v570
      %v572 = vpop.f32.mrb[0].mxu0
      %573 = vmatprep.mubr.f32.mxu0 %v430
      %574 = vmatmul.mubr.f32.gmra.mrb[0].mxu0 %v414
      %v575 = vpop.f32.mrb[0].mxu0
      %v576 = vadd.f32 %v477, %v575
      %v577 = vpop.f32.mrb[0].mxu0
      %578 = vmatprep.mubr.f32.mxu0 %v431
      %579 = vmatmul.mubr.f32.gmra.mrb[0].mxu0 %v415
      %v580 = vpop.f32.mrb[0].mxu0
      %v581 = vadd.f32 %v477, %v580
      %v582 = vpop.f32.mrb[0].mxu0
      %583 = vmatprep.mubr.f32.mxu0 %v432
      %584 = vmatmul.mubr.f32.gmra.mrb[0].mxu0 %v416
      %v585 = vpop.f32.mrb[0].mxu0
      %v586 = vadd.f32 %v477, %v585
      %v587 = vpop.f32.mrb[0].mxu0
      %588 = vmatprep.mubr.f32.mxu0 %v433
      %589 = vmatmul.mubr.f32.gmra.mrb[0].mxu0 %v417
      %v590 = vpop.f32.mrb[0].mxu0
      %v591 = vadd.f32 %v477, %v590
      %v592 = vpop.f32.mrb[0].mxu0
      %593 = vmatprep.mubr.f32.mxu0 %v434
      %594 = vmatmul.mubr.f32.gmra.mrb[0].mxu0 %v418
      %v595 = vpop.f32.mrb[0].mxu0
      %v596 = vadd.f32 %v477, %v595
      %v597 = vpop.f32.mrb[0].mxu0
      %598 = vmatprep.mubr.f32.mxu0 %v435
      %599 = vmatmul.mubr.f32.gmra.mrb[0].mxu0 %v419
      %v600 = vpop.f32.mrb[0].mxu0
      %v601 = vadd.f32 %v477, %v600
      %v602 = vpop.f32.mrb[0].mxu0
      %603 = vmatprep.mubr.f32.mxu0 %v436
      %604 = vmatmul.mubr.f32.gmra.mrb[0].mxu0 %v420
      %v605 = vpop.f32.mrb[0].mxu0
      %v606 = vadd.f32 %v477, %v605
      %v607 = vpop.f32.mrb[0].mxu0
      %608 = vmatprep.mubr.f32.mxu0 %v437
      %609 = vmatmul.mubr.f32.gmra.mrb[0].mxu0 %v421
      %v610 = vpop.f32.mrb[0].mxu0
      %v611 = vadd.f32 %v477, %v610
      %v612 = vpop.f32.mrb[0].mxu0
      %613 = vmatprep.mubr.f32.mxu0 %v438
      %614 = vmatmul.mubr.f32.gmra.mrb[0].mxu0 %v422
      %v615 = vpop.f32.mrb[0].mxu0
      %v616 = vadd.f32 %v477, %v615
      %v617 = vpop.f32.mrb[0].mxu0
      %618 = vmatprep.mubr.f32.mxu0 %v439
      %619 = vmatmul.mubr.f32.gmra.mrb[0].mxu0 %v423
      %v620 = vpop.f32.mrb[0].mxu0
      %v621 = vadd.f32 %v477, %v620
      %v622 = vpop.f32.mrb[0].mxu0
      %623 = vdwg.mxu0
      %vm624 = vcmp.ge.f32.partialorder %v546, 0.0
      %vm625 = vcmp.ge.f32.partialorder %v551, 0.0
      %vm626 = vcmp.ge.f32.partialorder %v556, 0.0
      %vm627 = vcmp.ge.f32.partialorder %v561, 0.0
      %vm628 = vcmp.ge.f32.partialorder %v566, 0.0
      %vm629 = vcmp.ge.f32.partialorder %v571, 0.0
      %vm630 = vcmp.ge.f32.partialorder %v576, 0.0
      %vm631 = vcmp.ge.f32.partialorder %v581, 0.0
      %vm632 = vcmp.ge.f32.partialorder %v586, 0.0
      %vm633 = vcmp.ge.f32.partialorder %v591, 0.0
      %vm634 = vcmp.ge.f32.partialorder %v596, 0.0
      %vm635 = vcmp.ge.f32.partialorder %v601, 0.0
      %vm636 = vcmp.ge.f32.partialorder %v606, 0.0
      %vm637 = vcmp.ge.f32.partialorder %v611, 0.0
      %vm638 = vcmp.ge.f32.partialorder %v616, 0.0
      %vm639 = vcmp.ge.f32.partialorder %v621, 0.0
      %v640 = vmul.f32 %v546, 0.2
      %v641 = vmul.f32 %v551, 0.2
      %v642 = vmul.f32 %v556, 0.2
      %v643 = vmul.f32 %v561, 0.2
      %v644 = vmul.f32 %v566, 0.2
      %v645 = vmul.f32 %v571, 0.2
      %v646 = vmul.f32 %v576, 0.2
      %v647 = vmul.f32 %v581, 0.2
      %v648 = vmul.f32 %v586, 0.2
      %v649 = vmul.f32 %v591, 0.2
      %v650 = vmul.f32 %v596, 0.2
      %v651 = vmul.f32 %v601, 0.2
      %v652 = vmul.f32 %v606, 0.2
      %v653 = vmul.f32 %v611, 0.2
      %v654 = vmul.f32 %v616, 0.2
      %v655 = vmul.f32 %v621, 0.2
      %v656 = vsel %vm624, %v546, %v640
      %v657 = vsel %vm625, %v551, %v641
      %v658 = vsel %vm626, %v556, %v642
      %v659 = vsel %vm627, %v561, %v643
      %v660 = vsel %vm628, %v566, %v644
      %v661 = vsel %vm629, %v571, %v645
      %v662 = vsel %vm630, %v576, %v646
      %v663 = vsel %vm631, %v581, %v647
      %v664 = vsel %vm632, %v586, %v648
      %v665 = vsel %vm633, %v591, %v649
      %v666 = vsel %vm634, %v596, %v650
      %v667 = vsel %vm635, %v601, %v651
      %v668 = vsel %vm636, %v606, %v652
      %v669 = vsel %vm637, %v611, %v653
      %v670 = vsel %vm638, %v616, %v654
      %v671 = vsel %vm639, %v621, %v655
      %672 = vst [vmem:[#allocation11] sm:$0xff] %v656
      %673 = vst [vmem:[#allocation11 + $0x8] sm:$0xff] %v657
      %674 = vst [vmem:[#allocation11 + $0x10] sm:$0xff] %v658
      %675 = vst [vmem:[#allocation11 + $0x18] sm:$0xff] %v659
      %676 = vst [vmem:[#allocation11 + $0x20] sm:$0xff] %v660
      %677 = vst [vmem:[#allocation11 + $0x28] sm:$0xff] %v661
      %678 = vst [vmem:[#allocation11 + $0x30] sm:$0xff] %v662
      %679 = vst [vmem:[#allocation11 + $0x38] sm:$0xff] %v663
      %680 = vst [vmem:[#allocation11 + $0x40] sm:$0xff] %v664
      %681 = vst [vmem:[#allocation11 + $0x48] sm:$0xff] %v665
      %682 = vst [vmem:[#allocation11 + $0x50] sm:$0xff] %v666
      %683 = vst [vmem:[#allocation11 + $0x58] sm:$0xff] %v667
      %684 = vst [vmem:[#allocation11 + $0x60] sm:$0xff] %v668
      %685 = vst [vmem:[#allocation11 + $0x68] sm:$0xff] %v669
      %686 = vst [vmem:[#allocation11 + $0x70] sm:$0xff] %v670
      %687 = vst [vmem:[#allocation11 + $0x78] sm:$0xff] %v671
      %v688 = vmul.f32 %v656, %v656
      %v689 = vmul.f32 %v657, %v657
      %v690 = vmul.f32 %v658, %v658
      %v691 = vmul.f32 %v659, %v659
      %v692 = vmul.f32 %v660, %v660
      %v693 = vmul.f32 %v661, %v661
      %v694 = vmul.f32 %v662, %v662
      %v695 = vmul.f32 %v663, %v663
      %v696 = vmul.f32 %v664, %v664
      %v697 = vmul.f32 %v665, %v665
      %v698 = vmul.f32 %v666, %v666
      %v699 = vmul.f32 %v667, %v667
      %v700 = vmul.f32 %v668, %v668
      %v701 = vmul.f32 %v669, %v669
      %v702 = vmul.f32 %v670, %v670
      %v703 = vmul.f32 %v671, %v671
      %704 = vadd.xlane.f32.xlu0 %v688
      %v705 = vpop.xlane.xlu0 %704
      %706 = vadd.xlane.f32.xlu0 %v689
      %v707 = vpop.xlane.xlu0 %706
      %708 = vadd.xlane.f32.xlu0 %v690
      %v709 = vpop.xlane.xlu0 %708
      %710 = vadd.xlane.f32.xlu0 %v691
      %v711 = vpop.xlane.xlu0 %710
      %712 = vadd.xlane.f32.xlu0 %v692
      %v713 = vpop.xlane.xlu0 %712
      %714 = vadd.xlane.f32.xlu0 %v693
      %v715 = vpop.xlane.xlu0 %714
      %716 = vadd.xlane.f32.xlu0 %v694
      %v717 = vpop.xlane.xlu0 %716
      %718 = vadd.xlane.f32.xlu0 %v695
      %v719 = vpop.xlane.xlu0 %718
      %720 = vadd.xlane.f32.xlu0 %v696
      %v721 = vpop.xlane.xlu0 %720
      %722 = vadd.xlane.f32.xlu0 %v697
      %v723 = vpop.xlane.xlu0 %722
      %724 = vadd.xlane.f32.xlu0 %v698
      %v725 = vpop.xlane.xlu0 %724
      %726 = vadd.xlane.f32.xlu0 %v699
      %v727 = vpop.xlane.xlu0 %726
      %728 = vadd.xlane.f32.xlu0 %v700
      %v729 = vpop.xlane.xlu0 %728
      %730 = vadd.xlane.f32.xlu0 %v701
      %v731 = vpop.xlane.xlu0 %730
      %732 = vadd.xlane.f32.xlu0 %v702
      %v733 = vpop.xlane.xlu0 %732
      %734 = vadd.xlane.f32.xlu0 %v703
      %v735 = vpop.xlane.xlu0 %734
      %v736 = vmax.f32 %v705, 1e-24
      %v737 = vmax.f32 %v707, 1e-24
      %v738 = vmax.f32 %v709, 1e-24
      %v739 = vmax.f32 %v711, 1e-24
      %v740 = vmax.f32 %v713, 1e-24
      %v741 = vmax.f32 %v715, 1e-24
      %v742 = vmax.f32 %v717, 1e-24
      %v743 = vmax.f32 %v719, 1e-24
      %v744 = vmax.f32 %v721, 1e-24
      %v745 = vmax.f32 %v723, 1e-24
      %v746 = vmax.f32 %v725, 1e-24
      %v747 = vmax.f32 %v727, 1e-24
      %v748 = vmax.f32 %v729, 1e-24
      %v749 = vmax.f32 %v731, 1e-24
      %v750 = vmax.f32 %v733, 1e-24
      %v751 = vmax.f32 %v735, 1e-24
      %v752 = vrsqrt.pop %v736
      %v753 = vrsqrt.pop %v737
      %v754 = vrsqrt.pop %v738
      %v755 = vrsqrt.pop %v739
      %v756 = vrsqrt.pop %v740
      %v757 = vrsqrt.pop %v741
      %v758 = vrsqrt.pop %v742
      %v759 = vrsqrt.pop %v743
      %v760 = vrsqrt.pop %v744
      %v761 = vrsqrt.pop %v745
      %v762 = vrsqrt.pop %v746
      %v763 = vrsqrt.pop %v747
      %v764 = vrsqrt.pop %v748
      %v765 = vrsqrt.pop %v749
      %v766 = vrsqrt.pop %v750
      %v767 = vrsqrt.pop %v751
      %v768 = vmul.f32 %v656, %v752
      %v769 = vmul.f32 %v657, %v753
      %v770 = vmul.f32 %v658, %v754
      %v771 = vmul.f32 %v659, %v755
      %v772 = vmul.f32 %v660, %v756
      %v773 = vmul.f32 %v661, %v757
      %v774 = vmul.f32 %v662, %v758
      %v775 = vmul.f32 %v663, %v759
      %v776 = vmul.f32 %v664, %v760
      %v777 = vmul.f32 %v665, %v761
      %v778 = vmul.f32 %v666, %v762
      %v779 = vmul.f32 %v667, %v763
      %v780 = vmul.f32 %v668, %v764
      %v781 = vmul.f32 %v669, %v765
      %v782 = vmul.f32 %v670, %v766
      %v783 = vmul.f32 %v671, %v767
      %784 = vst [vmem:[#allocation12] sm:$0xff] %v768
      %785 = vst [vmem:[#allocation12 + $0x8] sm:$0xff] %v769
      %786 = vst [vmem:[#allocation12 + $0x10] sm:$0xff] %v770
      %787 = vst [vmem:[#allocation12 + $0x18] sm:$0xff] %v771
      %788 = vst [vmem:[#allocation12 + $0x20] sm:$0xff] %v772
      %789 = vst [vmem:[#allocation12 + $0x28] sm:$0xff] %v773
      %790 = vst [vmem:[#allocation12 + $0x30] sm:$0xff] %v774
      %791 = vst [vmem:[#allocation12 + $0x38] sm:$0xff] %v775
      %792 = vst [vmem:[#allocation12 + $0x40] sm:$0xff] %v776
      %793 = vst [vmem:[#allocation12 + $0x48] sm:$0xff] %v777
      %794 = vst [vmem:[#allocation12 + $0x50] sm:$0xff] %v778
      %795 = vst [vmem:[#allocation12 + $0x58] sm:$0xff] %v779
      %796 = vst [vmem:[#allocation12 + $0x60] sm:$0xff] %v780
      %797 = vst [vmem:[#allocation12 + $0x68] sm:$0xff] %v781
      %798 = vst [vmem:[#allocation12 + $0x70] sm:$0xff] %v782
      %799 = vst [vmem:[#allocation12 + $0x78] sm:$0xff] %v783
    $region45: #{tpu_custom_call.1} parent=1 // pred_fallthru
      _
    // Predicated region
    $region46: #{tpu_custom_call.1} parent=1 // pred_check
      _
    $region47: #{tpu_custom_call.1} parent=1 // pred_check_branch
      %801 = sbr.rel (0) target = $region49
    $region48: #{tpu_custom_call.1} parent=1 // pred_region
      %s803 = ssub.s32 2048, 2048
      %804 = vsyncadd [#allocation5], %s803
      %s805 = sshll.u32 [#allocation11], 4
      %s806 = int_to_ptr.vmem [resolvable:$true] %s805
      %811 = dma.vmem_to_hbm [thread:$0]  %s806, 2048, %s5, [#allocation5], 128, 128, 8
    $region49: #{tpu_custom_call.1} parent=1 // pred_fallthru
      _
    // Predicated region
    $region50: #{tpu_custom_call.1} parent=1 // pred_check
      _
    $region51: #{tpu_custom_call.1} parent=1 // pred_check_branch
      %813 = sbr.rel (0) target = $region53
    $region52: #{tpu_custom_call.1} parent=1 // pred_region
      %s815 = ssub.s32 2048, 2048
      %816 = vsyncadd [#allocation13], %s815
      %s817 = sshll.u32 [#allocation12], 4
      %s818 = int_to_ptr.vmem [resolvable:$true] %s817
      %823 = dma.vmem_to_hbm [thread:$0]  %s818, 2048, %s6, [#allocation13], 128, 128, 8
    $region53: #{tpu_custom_call.1} parent=1 // pred_fallthru
      _
    // Predicated region
    $region54: #{tpu_custom_call.1} parent=1 // pred_check
      _
    $region55: #{tpu_custom_call.1} parent=1 // pred_check_branch
      %825 = sbr.rel (0) target = $region57
    $region56: #{tpu_custom_call.1} parent=1 // pred_region
      %826 = dma.done [#allocation5], 2048
    $region57: #{tpu_custom_call.1} parent=1 // pred_fallthru
      _
    // Predicated region
    $region58: #{tpu_custom_call.1} parent=1 // pred_check
      _
    $region59: #{tpu_custom_call.1} parent=1 // pred_check_branch
      %828 = sbr.rel (0) target = $region61
    $region60: #{tpu_custom_call.1} parent=1 // pred_region
      %829 = dma.done [#allocation13], 2048
    $region61: #{tpu_custom_call.1} parent=1 // pred_fallthru
      _
    %830 = vsyncpa [#allocation4], 1
    %831 = vsyncpa [#allocation7], 1
    %832 = vsyncpa [#allocation10], 1
    %833 = vsyncpa [#allocation5], 1
    %834 = vsyncpa [#allocation13], 1

</llo_original>
